<compile_context>
chip_gen: v5e
topology: v5e:2x2
jax: 0.10.0
libtpu: 0.0.40
codegen_flags: <defaults>
</compile_context>

<pallas_src>
import jax
import jax.numpy as jnp
from jax.experimental import pallas as pl
from jax.experimental.pallas import tpu as pltpu

_LANES = 128


def _disc_kernel(x_ref, w_ref, b_ref, o_ref):
    """One block: spectral-norm scale + dot + bias + sigmoid.

    x_ref: (TN, R, 128) VMEM  (K folded sublane-stack x lane; f32 or bf16)
    w_ref: (R, 128)     f32 VMEM  (raw, un-normalized conv weight, resident)
    b_ref: (1,)         f32 SMEM  (conv bias)
    o_ref: (TN, 1)      f32 VMEM
    """
    w = w_ref[...]                                      # (R, 128)
    # Spectral norm of a 1-row weight matrix == its L2 norm (the converged
    # power-iteration value).  Applied as a scalar 1/sigma on the logit.
    # TODO(synk): PyTorch's spectral_norm adds eps=1e-12 and uses un-converged
    # power-iteration estimates right after init; an all-zero weight gives inf.
    inv_sigma = jax.lax.rsqrt(jnp.sum(w * w))

    x = x_ref[...].astype(jnp.float32)                  # (TN, R, 128)
    prod = x * w[None, :, :]
    # Reduce the R (sublane-stack) axis FIRST: bulk of the sum is plain VPU
    # vadds; only one cross-lane (XLU) reduce per output row remains.
    partial = jnp.sum(prod, axis=1)                     # (TN, 128)  mostly VPU
    acc = jnp.sum(partial, axis=1, keepdims=True)       # (TN, 1)    one XLU/row

    logit = acc * inv_sigma + b_ref[0]
    o_ref[...] = jax.nn.sigmoid(logit).astype(o_ref.dtype)


def discriminator_forward_flat(x_flat, weight, bias, *, tile_n=128):
    """sigmoid(spectral_norm(conv5)(x)) given x already flattened lane-dense.

    x_flat: (N, K) float32 or bfloat16; K = C*KH*KW flattened in (c, h, w)
            row-major order (what x.view(N, -1) gives in PyTorch).
    weight: (1, C, KH, KW) f32 raw conv weight.   bias: (1,) f32.
    Returns (N, 1) float32.
    """
    N, K = x_flat.shape
    OC = weight.shape[0]
    assert OC == 1 and weight.size == K, "conv5 expects a full-map 4x4 valid conv"
    assert K % _LANES == 0
    R = K // _LANES

    x_dense = x_flat.reshape(N, R, _LANES)
    w_dense = weight.reshape(R, _LANES).astype(jnp.float32)
    b = bias.reshape(1).astype(jnp.float32)

    bytes_per_x = jnp.dtype(x_flat.dtype).itemsize
    cost = pl.CostEstimate(
        flops=2 * N * K,
        transcendentals=N + 1,                    # sigmoid exps + rsqrt(s)
        bytes_accessed=N * K * bytes_per_x + K * 4 + 4 + N * 4,
    )

    if N <= tile_n:
        # Tiny batch: the whole problem fits trivially in VMEM; a grid would
        # only add ~0.35 us/step of overhead.
        return pl.pallas_call(
            _disc_kernel,
            out_shape=jax.ShapeDtypeStruct((N, 1), jnp.float32),
            in_specs=[
                pl.BlockSpec(memory_space=pltpu.MemorySpace.VMEM),   # x resident
                pl.BlockSpec(memory_space=pltpu.MemorySpace.VMEM),   # w resident
                pl.BlockSpec(memory_space=pltpu.MemorySpace.SMEM),   # bias scalar
            ],
            out_specs=pl.BlockSpec(memory_space=pltpu.MemorySpace.VMEM),
            cost_estimate=cost,
        )(x_dense, w_dense, b)

    # Training-size batch: stream x through VMEM in (tile_n, R, 128) blocks,
    # double-buffered by the Pallas pipeline.  The weight block index is
    # constant so it is fetched once and stays resident.  "parallel" shards the
    # batch axis across both TensorCores on v7x; it is a no-op on v5e/v6e.
    x_block_bytes = tile_n * R * _LANES * bytes_per_x
    vmem_bytes = 2 * x_block_bytes + R * _LANES * 4 + 2 * tile_n * 4 + (2 << 20)
    vmem_bytes = int(max(vmem_bytes, 32 << 20))   # <= physical VMEM on all gens

    return pl.pallas_call(
        _disc_kernel,
        out_shape=jax.ShapeDtypeStruct((N, 1), jnp.float32),
        grid_spec=pltpu.PrefetchScalarGridSpec(
            num_scalar_prefetch=0,
            grid=(pl.cdiv(N, tile_n),),
            in_specs=[
                pl.BlockSpec((tile_n, R, _LANES), lambda i: (i, 0, 0)),  # stream x
                pl.BlockSpec((R, _LANES), lambda i: (0, 0)),             # resident w
                pl.BlockSpec(memory_space=pltpu.MemorySpace.SMEM),       # bias
            ],
            out_specs=pl.BlockSpec((tile_n, 1), lambda i: (i, 0)),
        ),
        compiler_params=pltpu.CompilerParams(
            dimension_semantics=("parallel",),
            vmem_limit_bytes=vmem_bytes,
        ),
        cost_estimate=cost,
    )(x_dense, w_dense, b)


def discriminator_forward(x_nchw, weight, bias, *, tile_n=128):
    """PyTorch-layout entry point: x is (N, 1024, 4, 4) NCHW -> (N, 1, 1, 1).

    NOTE(perf): the (..., 4, 4) minor dims of an NCHW tensor sit in a padded
    (8,128)-tiled TPU layout, so this reshape is a real XLA relayout pass (full
    HBM read+write of x) outside the kernel.  For production, have the producer
    emit the activation already flattened as (N, 16384) and call
    discriminator_forward_flat directly (~1.5-2x end-to-end for this mem-bound op).
    """
    N, C, H, W = x_nchw.shape
    OC, IC, KH, KW = weight.shape
    assert OC == 1 and (C, H, W) == (IC, KH, KW), "conv5 expects a 4x4x1024 map"
    out = discriminator_forward_flat(
        x_nchw.reshape(N, C * H * W), weight, bias, tile_n=tile_n
    )
    return out.reshape(N, OC, 1, 1)


def _reference_forward(x_nchw, weight, bias):
    """Pure-JAX reference of the same math for a sanity check."""
    N, C, H, W = x_nchw.shape
    OC = weight.shape[0]
    K = C * H * W
    w_flat = weight.reshape(OC, K).astype(jnp.float32)
    sigma = jnp.sqrt(jnp.sum(w_flat * w_flat))
    w_sn = w_flat / sigma
    logits = x_nchw.reshape(N, K).astype(jnp.float32) @ w_sn.T + bias[None, :]
    return jax.nn.sigmoid(logits).reshape(N, OC, 1, 1)


if __name__ == "__main__":
    key = jax.random.PRNGKey(0)
    k_x, k_w, k_b, k_x2 = jax.random.split(key, 4)

    d = 128
    C, H, W = d * 8, 4, 4            # conv5 input: (N, 1024, 4, 4)
    OC, KH, KW = 1, 4, 4

    # Deterministic "kaiming-uniform-like" init for the conv weight / bias.
    fan_in = C * KH * KW
    bound = 1.0 / jnp.sqrt(fan_in)
    weight = jax.random.uniform(
        k_w, (OC, C, KH, KW), jnp.float32, minval=-bound, maxval=bound
    )
    bias = jax.random.uniform(k_b, (OC,), jnp.float32, minval=-bound, maxval=bound)

    # 1) Tiny batch (module spec): grid-less fully-resident path.
    N_small = 2
    x_small = jax.random.normal(k_x, (N_small, C, H, W), jnp.float32)
    out_small = jax.block_until_ready(discriminator_forward(x_small, weight, bias))
    ref_small = _reference_forward(x_small, weight, bias)
    assert out_small.shape == (N_small, 1, 1, 1)
    assert jnp.allclose(out_small, ref_small, atol=1e-5, rtol=1e-5)

    # 2) Batched path: streaming batch grid (small tile just to exercise the
    #    pipeline here; use tile_n=128 for production batches).
    N_big, tile_n = 48, 16
    x_big = jax.random.normal(k_x2, (N_big, C, H, W), jnp.float32)
    out_big = jax.block_until_ready(
        discriminator_forward(x_big, weight, bias, tile_n=tile_n)
    )
    ref_big = _reference_forward(x_big, weight, bias)
    assert out_big.shape == (N_big, 1, 1, 1)
    assert jnp.allclose(out_big, ref_big, atol=1e-5, rtol=1e-5)

    # 3) bf16 activation path (halves streamed HBM bytes; accumulation in f32).
    out_bf16 = jax.block_until_ready(
        discriminator_forward(x_big.astype(jnp.bfloat16), weight, bias, tile_n=tile_n)
    )
    assert jnp.allclose(out_bf16, ref_big, atol=2e-2, rtol=2e-2)

    print("KERNEL_OK")
</pallas_src>

<mosaic_0001>
module attributes {stable_mosaic.version = 11 : i64} {
  func.func @_disc_kernel(%arg0: memref<2x128x128xf32, #tpu.memory_space<vmem>>, %arg1: memref<128x128xf32, #tpu.memory_space<vmem>>, %arg2: memref<1xf32, #tpu.memory_space<smem>>, %arg3: memref<2x1xf32, #tpu.memory_space<vmem>>) attributes {dimension_semantics = [], scalar_prefetch = 0 : i64, scratch_operands = 0 : i64, tpu.core_type = #tpu.core_type<tc>} {
    %c0 = arith.constant 0 : index
    %c0_0 = arith.constant 0 : index
    %0 = vector.load %arg1[%c0, %c0_0] : memref<128x128xf32, #tpu.memory_space<vmem>>, vector<128x128xf32>
    %1 = arith.mulf %0, %0 : vector<128x128xf32>
    %2 = vector.shape_cast %1 : vector<128x128xf32> to vector<1x128x128xf32>
    %cst = arith.constant dense<0.000000e+00> : vector<1xf32>
    %3 = vector.multi_reduction <add>, %2, %cst [1, 2] : vector<1x128x128xf32> to vector<1xf32>
    %4 = vector.shape_cast %3 : vector<1xf32> to vector<1x1x1xf32>
    %5 = vector.extract %4[0, 0, 0] : f32 from vector<1x1x1xf32>
    %6 = math.rsqrt %5 : f32
    %c0_1 = arith.constant 0 : index
    %c0_2 = arith.constant 0 : index
    %c0_3 = arith.constant 0 : index
    %7 = vector.load %arg0[%c0_1, %c0_2, %c0_3] : memref<2x128x128xf32, #tpu.memory_space<vmem>>, vector<2x128x128xf32>
    %8 = vector.shape_cast %0 : vector<128x128xf32> to vector<1x128x128xf32>
    %9 = vector.broadcast %8 : vector<1x128x128xf32> to vector<2x128x128xf32>
    %10 = arith.mulf %7, %9 : vector<2x128x128xf32>
    %cst_4 = arith.constant dense<0.000000e+00> : vector<2x128xf32>
    %11 = vector.multi_reduction <add>, %10, %cst_4 [1] : vector<2x128x128xf32> to vector<2x128xf32>
    %cst_5 = arith.constant dense<0.000000e+00> : vector<2xf32>
    %12 = vector.multi_reduction <add>, %11, %cst_5 [1] : vector<2x128xf32> to vector<2xf32>
    %13 = vector.shape_cast %12 : vector<2xf32> to vector<2x1xf32>
    %14 = vector.broadcast %6 : f32 to vector<2x1xf32>
    %15 = arith.mulf %13, %14 : vector<2x1xf32>
    %c0_6 = arith.constant 0 : index
    %16 = memref.load %arg2[%c0_6] : memref<1xf32, #tpu.memory_space<smem>>
    %17 = vector.broadcast %16 : f32 to vector<2x1xf32>
    %18 = arith.addf %15, %17 : vector<2x1xf32>
    %19 = arith.negf %18 : vector<2x1xf32>
    %20 = math.exp %19 : vector<2x1xf32>
    %cst_7 = arith.constant 1.000000e+00 : f32
    %21 = vector.broadcast %cst_7 : f32 to vector<2x1xf32>
    %22 = arith.addf %21, %20 : vector<2x1xf32>
    %23 = arith.divf %21, %22 : vector<2x1xf32>
    %c0_8 = arith.constant 0 : index
    %c0_9 = arith.constant 0 : index
    %24 = vector.load %arg3[%c0_8, %c0_9] : memref<2x1xf32, #tpu.memory_space<vmem>>, vector<2x1xf32>
    tpu.vector_store %arg3[%c0_8, %c0_9], %23 {strides = array<i32>} : memref<2x1xf32, #tpu.memory_space<vmem>>, vector<2x1xf32>,
    return
  }
}

</mosaic_0001>

<llo_original>
// kernel: tpu_custom_call.1
$region0: #{tpu_custom_call.1}
  #allocation0 [shape = 'u32[]', space=smem, size = 0x4, offset = 0x4, fixed_abs, tag = 'smem constant byte address 0x4 - core index']
  #allocation1 [shape = 'u32[72,128]{1,0:T(1,128)}', space=vmem, size = 0x9000, scoped, tag = 'internal scratch']
  #allocation2 [shape = 'f32[1]{0:T(128)S(6)}', space=smem, size = 0x200, scoped, tag = 'scoped memory for tpu_custom_call.1']
  %s0 = inlined_call_operand.hbm [shape: f32[2,128,128], index: 0, kind: input, shape index: {}]
  %s1 = inlined_call_operand.hbm [shape: f32[128,128], index: 1, kind: input, shape index: {}]
  %s2 = inlined_call_operand.<no memory space> [shape: f32[1], index: 2, kind: input, shape index: {}]
  %s3 = inlined_call_operand.vmem [shape: f32[2,1], index: 3, kind: output, shape index: {}]
  %s4 = sld [smem:[#allocation0]]
  $region30: #{tpu_custom_call.1} parent=0
    _
  %s6 = ssub.s32 1, %s4
  %s7 = scalar_select 0, %s6, %s4
  %8 = sst [smem:[#allocation2]] %s2
  $region1: #{tpu_custom_call.1} parent=0
    #allocation3 [shape = 'u8[131072]{0}', space=vmem, size = 0x20000, scoped, tag = 'input window, operand 0, single buffered']
    #allocation4 [shape = 's32[1]{0}', space=sflag, size = 0x4, scoped, tag = 'scoped memory for tpu_custom_call.1']
    #allocation5 [shape = 'u8[65536]{0}', space=vmem, size = 0x10000, scoped, tag = 'input window, operand 1, single buffered']
    #allocation6 [shape = 's32[1]{0}', space=sflag, size = 0x4, scoped, tag = 'scoped memory for tpu_custom_call.1']
    %9 = vsyncpa [#allocation4], 0
    %10 = vsyncpa [#allocation6], 0
    // Predicated region
    $region2: #{tpu_custom_call.1} parent=1 // pred_check
      _
    $region3: #{tpu_custom_call.1} parent=1 // pred_check_branch
      %12 = sbr.rel (0) target = $region5
    $region4: #{tpu_custom_call.1} parent=1 // pred_region
      %14 = vsyncadd [#allocation4], 0
      %s15 = sshll.u32 %s0, 4
      %s16 = int_to_ptr.hbm [resolvable:$true] %s15
      %s17 = sshll.u32 [#allocation3], 4
      %s18 = int_to_ptr.vmem [resolvable:$true] %s17
      %23 = dma.hbm_to_vmem [thread:$0]  %s16, 4096, %s18, [#allocation4], 128, 128, 8
    $region5: #{tpu_custom_call.1} parent=1 // pred_fallthru
      _
    // Predicated region
    $region6: #{tpu_custom_call.1} parent=1 // pred_check
      _
    $region7: #{tpu_custom_call.1} parent=1 // pred_check_branch
      %25 = sbr.rel (0) target = $region9
    $region8: #{tpu_custom_call.1} parent=1 // pred_region
      %27 = vsyncadd [#allocation6], 0
      %s28 = sshll.u32 %s1, 4
      %s29 = int_to_ptr.hbm [resolvable:$true] %s28
      %s30 = sshll.u32 [#allocation5], 4
      %s31 = int_to_ptr.vmem [resolvable:$true] %s30
      %36 = dma.hbm_to_vmem [thread:$0]  %s29, 2048, %s31, [#allocation6], 128, 128, 8
    $region9: #{tpu_custom_call.1} parent=1 // pred_fallthru
      _
    // Predicated region
    $region10: #{tpu_custom_call.1} parent=1 // pred_check
      _
    $region11: #{tpu_custom_call.1} parent=1 // pred_check_branch
      %38 = sbr.rel (0) target = $region13
    $region12: #{tpu_custom_call.1} parent=1 // pred_region
      _
    $region13: #{tpu_custom_call.1} parent=1 // pred_fallthru
      _
    // Predicated region
    $region14: #{tpu_custom_call.1} parent=1 // pred_check
      _
    $region15: #{tpu_custom_call.1} parent=1 // pred_check_branch
      %40 = sbr.rel (0) target = $region17
    $region16: #{tpu_custom_call.1} parent=1 // pred_region
      %42 = dma.done [#allocation4], 4096
    $region17: #{tpu_custom_call.1} parent=1 // pred_fallthru
      _
    // Predicated region
    $region18: #{tpu_custom_call.1} parent=1 // pred_check
      _
    $region19: #{tpu_custom_call.1} parent=1 // pred_check_branch
      %44 = sbr.rel (0) target = $region21
    $region20: #{tpu_custom_call.1} parent=1 // pred_region
      %46 = dma.done [#allocation6], 2048
    $region21: #{tpu_custom_call.1} parent=1 // pred_fallthru
      _
    %v47 = vld [vmem:[#allocation5] sm:$0xff]
    %v48 = vld [vmem:[#allocation5 + $0x8] sm:$0xff]
    %v49 = vld [vmem:[#allocation5 + $0x10] sm:$0xff]
    %v50 = vld [vmem:[#allocation5 + $0x18] sm:$0xff]
    %v51 = vld [vmem:[#allocation5 + $0x20] sm:$0xff]
    %v52 = vld [vmem:[#allocation5 + $0x28] sm:$0xff]
    %v53 = vld [vmem:[#allocation5 + $0x30] sm:$0xff]
    %v54 = vld [vmem:[#allocation5 + $0x38] sm:$0xff]
    %v55 = vld [vmem:[#allocation5 + $0x40] sm:$0xff]
    %v56 = vld [vmem:[#allocation5 + $0x48] sm:$0xff]
    %v57 = vld [vmem:[#allocation5 + $0x50] sm:$0xff]
    %v58 = vld [vmem:[#allocation5 + $0x58] sm:$0xff]
    %v59 = vld [vmem:[#allocation5 + $0x60] sm:$0xff]
    %v60 = vld [vmem:[#allocation5 + $0x68] sm:$0xff]
    %v61 = vld [vmem:[#allocation5 + $0x70] sm:$0xff]
    %v62 = vld [vmem:[#allocation5 + $0x78] sm:$0xff]
    %v63 = vmul.f32 %v47, %v47
    %v64 = vmul.f32 %v48, %v48
    %v65 = vmul.f32 %v49, %v49
    %v66 = vmul.f32 %v50, %v50
    %v67 = vmul.f32 %v51, %v51
    %v68 = vmul.f32 %v52, %v52
    %v69 = vmul.f32 %v53, %v53
    %v70 = vmul.f32 %v54, %v54
    %v71 = vmul.f32 %v55, %v55
    %v72 = vmul.f32 %v56, %v56
    %v73 = vmul.f32 %v57, %v57
    %v74 = vmul.f32 %v58, %v58
    %v75 = vmul.f32 %v59, %v59
    %v76 = vmul.f32 %v60, %v60
    %v77 = vmul.f32 %v61, %v61
    %v78 = vmul.f32 %v62, %v62
    %v79 = vadd.f32 %v63, %v64
    %v80 = vadd.f32 %v79, %v65
    %v81 = vadd.f32 %v80, %v66
    %v82 = vadd.f32 %v81, %v67
    %v83 = vadd.f32 %v82, %v68
    %v84 = vadd.f32 %v83, %v69
    %v85 = vadd.f32 %v84, %v70
    %v86 = vadd.f32 %v85, %v71
    %v87 = vadd.f32 %v86, %v72
    %v88 = vadd.f32 %v87, %v73
    %v89 = vadd.f32 %v88, %v74
    %v90 = vadd.f32 %v89, %v75
    %v91 = vadd.f32 %v90, %v76
    %v92 = vadd.f32 %v91, %v77
    %v93 = vadd.f32 %v92, %v78
    %94 = vadd.xlane.f32.xlu0 %v93
    %v95 = vpop.xlane.xlu0 %94
    %v96 = vrot.slane %v95, 4
    %v97 = vadd.f32 %v95, %v96
    %v98 = vrot.slane %v97, 2
    %v99 = vadd.f32 %v97, %v98
    %v100 = vrot.slane %v99, 1
    %v101 = vadd.f32 %v99, %v100
    %s102 = vtos %v101
    %v103 = vstv %s102
    %v104 = vrsqrt.pop %v103
    %v105 = vmul.f32 %v104, %v103
    %v106 = vmul.f32 %v105, %v104
    %v107 = vmul.f32 0.5, %v106
    %v108 = vsub.f32 1.5, %v107
    %v109 = vmul.f32 %v104, %v108
    %vm110 = vweird.f32 %v103
    %vm111 = vweird.f32 %v104
    %vm112 = vmor %vm110, %vm111
    %v113 = vsel %vm112, %v104, %v109
    %s114 = vtos %v113
    %v115 = vld [vmem:[#allocation3] sm:$0xff]
    %v116 = vld [vmem:[#allocation3 + $0x8] sm:$0xff]
    %v117 = vld [vmem:[#allocation3 + $0x10] sm:$0xff]
    %v118 = vld [vmem:[#allocation3 + $0x18] sm:$0xff]
    %v119 = vld [vmem:[#allocation3 + $0x20] sm:$0xff]
    %v120 = vld [vmem:[#allocation3 + $0x28] sm:$0xff]
    %v121 = vld [vmem:[#allocation3 + $0x30] sm:$0xff]
    %v122 = vld [vmem:[#allocation3 + $0x38] sm:$0xff]
    %v123 = vld [vmem:[#allocation3 + $0x40] sm:$0xff]
    %v124 = vld [vmem:[#allocation3 + $0x48] sm:$0xff]
    %v125 = vld [vmem:[#allocation3 + $0x50] sm:$0xff]
    %v126 = vld [vmem:[#allocation3 + $0x58] sm:$0xff]
    %v127 = vld [vmem:[#allocation3 + $0x60] sm:$0xff]
    %v128 = vld [vmem:[#allocation3 + $0x68] sm:$0xff]
    %v129 = vld [vmem:[#allocation3 + $0x70] sm:$0xff]
    %v130 = vld [vmem:[#allocation3 + $0x78] sm:$0xff]
    %v131 = vld [vmem:[#allocation3 + $0x80] sm:$0xff]
    %v132 = vld [vmem:[#allocation3 + $0x88] sm:$0xff]
    %v133 = vld [vmem:[#allocation3 + $0x90] sm:$0xff]
    %v134 = vld [vmem:[#allocation3 + $0x98] sm:$0xff]
    %v135 = vld [vmem:[#allocation3 + $0xa0] sm:$0xff]
    %v136 = vld [vmem:[#allocation3 + $0xa8] sm:$0xff]
    %v137 = vld [vmem:[#allocation3 + $0xb0] sm:$0xff]
    %v138 = vld [vmem:[#allocation3 + $0xb8] sm:$0xff]
    %v139 = vld [vmem:[#allocation3 + $0xc0] sm:$0xff]
    %v140 = vld [vmem:[#allocation3 + $0xc8] sm:$0xff]
    %v141 = vld [vmem:[#allocation3 + $0xd0] sm:$0xff]
    %v142 = vld [vmem:[#allocation3 + $0xd8] sm:$0xff]
    %v143 = vld [vmem:[#allocation3 + $0xe0] sm:$0xff]
    %v144 = vld [vmem:[#allocation3 + $0xe8] sm:$0xff]
    %v145 = vld [vmem:[#allocation3 + $0xf0] sm:$0xff]
    %v146 = vld [vmem:[#allocation3 + $0xf8] sm:$0xff]
    %v147 = vmul.f32 %v115, %v47
    %v148 = vmul.f32 %v116, %v48
    %v149 = vmul.f32 %v117, %v49
    %v150 = vmul.f32 %v118, %v50
    %v151 = vmul.f32 %v119, %v51
    %v152 = vmul.f32 %v120, %v52
    %v153 = vmul.f32 %v121, %v53
    %v154 = vmul.f32 %v122, %v54
    %v155 = vmul.f32 %v123, %v55
    %v156 = vmul.f32 %v124, %v56
    %v157 = vmul.f32 %v125, %v57
    %v158 = vmul.f32 %v126, %v58
    %v159 = vmul.f32 %v127, %v59
    %v160 = vmul.f32 %v128, %v60
    %v161 = vmul.f32 %v129, %v61
    %v162 = vmul.f32 %v130, %v62
    %v163 = vmul.f32 %v131, %v47
    %v164 = vmul.f32 %v132, %v48
    %v165 = vmul.f32 %v133, %v49
    %v166 = vmul.f32 %v134, %v50
    %v167 = vmul.f32 %v135, %v51
    %v168 = vmul.f32 %v136, %v52
    %v169 = vmul.f32 %v137, %v53
    %v170 = vmul.f32 %v138, %v54
    %v171 = vmul.f32 %v139, %v55
    %v172 = vmul.f32 %v140, %v56
    %v173 = vmul.f32 %v141, %v57
    %v174 = vmul.f32 %v142, %v58
    %v175 = vmul.f32 %v143, %v59
    %v176 = vmul.f32 %v144, %v60
    %v177 = vmul.f32 %v145, %v61
    %v178 = vmul.f32 %v146, %v62
    %v179 = vadd.f32 %v147, %v148
    %v180 = vadd.f32 %v179, %v149
    %v181 = vadd.f32 %v180, %v150
    %v182 = vadd.f32 %v181, %v151
    %v183 = vadd.f32 %v182, %v152
    %v184 = vadd.f32 %v183, %v153
    %v185 = vadd.f32 %v184, %v154
    %v186 = vadd.f32 %v185, %v155
    %v187 = vadd.f32 %v186, %v156
    %v188 = vadd.f32 %v187, %v157
    %v189 = vadd.f32 %v188, %v158
    %v190 = vadd.f32 %v189, %v159
    %v191 = vadd.f32 %v190, %v160
    %v192 = vadd.f32 %v191, %v161
    %v193 = vadd.f32 %v192, %v162
    %v194 = vrot.slane %v193, 4
    %v195 = vadd.f32 %v193, %v194
    %v196 = vrot.slane %v195, 2
    %v197 = vadd.f32 %v195, %v196
    %v198 = vrot.slane %v197, 1
    %v199 = vadd.f32 %v197, %v198
    %v200 = vadd.f32 %v163, %v164
    %v201 = vadd.f32 %v200, %v165
    %v202 = vadd.f32 %v201, %v166
    %v203 = vadd.f32 %v202, %v167
    %v204 = vadd.f32 %v203, %v168
    %v205 = vadd.f32 %v204, %v169
    %v206 = vadd.f32 %v205, %v170
    %v207 = vadd.f32 %v206, %v171
    %v208 = vadd.f32 %v207, %v172
    %v209 = vadd.f32 %v208, %v173
    %v210 = vadd.f32 %v209, %v174
    %v211 = vadd.f32 %v210, %v175
    %v212 = vadd.f32 %v211, %v176
    %v213 = vadd.f32 %v212, %v177
    %v214 = vadd.f32 %v213, %v178
    %v215 = vrot.slane %v214, 4
    %v216 = vadd.f32 %v214, %v215
    %v217 = vrot.slane %v216, 2
    %v218 = vadd.f32 %v216, %v217
    %v219 = vrot.slane %v218, 1
    %v220 = vadd.f32 %v218, %v219
    %vm223 = vcmask 1041409
    %v224 = vsel %vm223, %v220, %v199
    %vm226 = vcmask 1041408
    %v227 = vsel %vm226, %v224, 0.0
    %228 = vadd.xlane.f32.xlu0 %v227
    %v229 = vpop.xlane.xlu0 %228
    %v230 = vstv %s114
    %v231 = vmul.f32 %v229, %v230
    %s232 = sld [smem:[#allocation2]]
    %v233 = vstv %s232
    %v234 = vadd.f32 %v231, %v233
    %v235 = vxor.u32 %v234, 2147483648
    %v236 = vmul.f32 %v235, 1.442695
    %v237 = vpow.pop %v236
    %v238 = vadd.f32 %v237, 1.0
    %v239 = vrcp.pop %v238
    %v240 = vmul.f32 %v238, %v239
    %v241 = vsub.f32 1.0, %v240
    %v242 = vmul.f32 %v239, %v241
    %v243 = vadd.f32 %v239, %v242
    %vm244 = vweird.f32 %v238
    %vm245 = vweird.f32 %v239
    %vm246 = vmor %vm244, %vm245
    %v247 = vsel %vm246, %v239, %v243
    %v248 = vand.u32 2147483647, %v238
    %vm249 = vcmp.eq.f32.partialorder %v248, 8.507059e+37
    %v250 = vand.u32 %v238, 2147483648
    %v251 = vor.u32 1.1754944e-38, %v250
    %v252 = vsel %vm249, %v251, %v247
    %v253 = vmul.f32 1.0, %v252
    %vm254 = vcmask 1024
    %255 = vst.msk [vmem:[%s3] sm:$0x3] %vm254, %v253
    // Predicated region
    $region22: #{tpu_custom_call.1} parent=1 // pred_check
      _
    $region23: #{tpu_custom_call.1} parent=1 // pred_check_branch
      %257 = sbr.rel (0) target = $region25
    $region24: #{tpu_custom_call.1} parent=1 // pred_region
      _
    $region25: #{tpu_custom_call.1} parent=1 // pred_fallthru
      _
    // Predicated region
    $region26: #{tpu_custom_call.1} parent=1 // pred_check
      _
    $region27: #{tpu_custom_call.1} parent=1 // pred_check_branch
      %259 = sbr.rel (0) target = $region29
    $region28: #{tpu_custom_call.1} parent=1 // pred_region
      _
    $region29: #{tpu_custom_call.1} parent=1 // pred_fallthru
      _
    %260 = vsyncpa [#allocation4], 1
    %261 = vsyncpa [#allocation6], 1

</llo_original>
